<compile_context>
chip_gen: v7x
topology: tpu7x:2x2x1
jax: 0.10.0
libtpu: 0.0.40
codegen_flags: <defaults>
</compile_context>

<pallas_src>
import functools

import jax
import jax.numpy as jnp
from jax.experimental import pallas as pl
from jax.experimental.pallas import tpu as pltpu


def _round_up(x, m):
    return ((x + m - 1) // m) * m


def _mlp_heads(f_f32, w13, b13, w24, b24, d_project):
    """Both projection MLPs as one packed matmul pair (bf16 MXU, f32 accum)."""
    f_bf = f_f32.astype(jnp.bfloat16)
    h = jnp.dot(f_bf, w13, preferred_element_type=jnp.float32) + b13   # [TB, 2H]
    h = jnp.where(h >= 0, h, 0.1 * h)                                  # LeakyReLU(0.1), f32
    p = jnp.dot(h.astype(jnp.bfloat16), w24,
                preferred_element_type=jnp.float32) + b24              # [TB, 2P]
    return p[:, :d_project], p[:, d_project:]


def _disc_kernel_cond(n_classes, d_project,
                      feat_ref, y_ref, emb_ref,
                      wlin_ref, blin_ref, w13_ref, b13_ref, w24_ref, b24_ref,
                      d_ref, p1_ref, p2_ref):
    f = feat_ref[...]                                                  # [TB, d_penul] f32
    tb = f.shape[0]

    # In-kernel embedding gather: one-hot(y) @ emb (emb is tiny & VMEM-resident).
    y = y_ref[...]                                                     # [TB, 1] i32
    cls = jax.lax.broadcasted_iota(jnp.int32, (tb, n_classes), 1)
    onehot = (cls == y).astype(jnp.float32)                            # [TB, n_classes]
    w_y = jnp.dot(onehot, emb_ref[...],
                  preferred_element_type=jnp.float32)                  # [TB, d_penul]

    # Fused scalar head: Linear(f) + sum(f * emb[y]) == sum(f * (w_lin_row + emb[y])) + b
    w_eff = wlin_ref[...] + w_y                                        # [TB, d_penul]
    d = jnp.sum(f * w_eff, axis=1, keepdims=True) + blin_ref[...]      # [TB, 1]
    d_ref[...] = jnp.broadcast_to(d, d_ref.shape)                      # lane-dense slab

    p1, p2 = _mlp_heads(f, w13_ref[...], b13_ref[...],
                        w24_ref[...], b24_ref[...], d_project)
    p1_ref[...] = p1
    p2_ref[...] = p2


def _disc_kernel_uncond(d_project,
                        feat_ref,
                        wlin_ref, blin_ref, w13_ref, b13_ref, w24_ref, b24_ref,
                        d_ref, p1_ref, p2_ref):
    f = feat_ref[...]                                                  # [TB, d_penul] f32
    d = jnp.sum(f * wlin_ref[...], axis=1, keepdims=True) + blin_ref[...]
    d_ref[...] = jnp.broadcast_to(d, d_ref.shape)

    p1, p2 = _mlp_heads(f, w13_ref[...], b13_ref[...],
                        w24_ref[...], b24_ref[...], d_project)
    p1_ref[...] = p1
    p2_ref[...] = p2


def base_discriminator_forward(features, y, packed, *, tile_b=512):
    """features: [B, d_penul] float32, y: [B] int32 class ids (or None)."""
    B, d_penul = features.shape
    d_project = packed["b24"].shape[1] // 2
    n_classes = packed["emb"].shape[0]

    # Batch tile: 8-aligned, capped by tile_b; pad B up to a multiple of TB.
    TB = min(tile_b, _round_up(max(B, 1), 8))
    Bp = _round_up(B, TB)
    n_tiles = Bp // TB

    f = features.astype(jnp.float32)
    if Bp != B:
        f = jnp.pad(f, ((0, Bp - B), (0, 0)))

    def row_spec(arr):      # tiled along batch
        return pl.BlockSpec((TB, arr.shape[1]), lambda i: (i, 0))

    def const_spec(arr):    # VMEM-resident across all grid steps
        return pl.BlockSpec(arr.shape, lambda i: (0, 0))

    weight_ins = [packed["w_lin_row"], packed["b_lin"],
                  packed["w13"], packed["b13"], packed["w24"], packed["b24"]]

    out_shapes = (
        jax.ShapeDtypeStruct((Bp, 128), jnp.float32),        # lane-dense scalar-head slab
        jax.ShapeDtypeStruct((Bp, d_project), jnp.float32),  # projection
        jax.ShapeDtypeStruct((Bp, d_project), jnp.float32),  # projection2
    )
    out_specs = (
        pl.BlockSpec((TB, 128), lambda i: (i, 0)),
        pl.BlockSpec((TB, d_project), lambda i: (i, 0)),
        pl.BlockSpec((TB, d_project), lambda i: (i, 0)),
    )
    cparams = pltpu.CompilerParams(
        dimension_semantics=("parallel",),           # v7x: shard batch tiles over 2 TCs
        vmem_limit_bytes=32 * 1024 * 1024,           # safe on v7x's 64 MiB VMEM
    )

    if y is not None:
        y2d = y.astype(jnp.int32).reshape(B, 1)
        if Bp != B:
            y2d = jnp.pad(y2d, ((0, Bp - B), (0, 0)))
        kernel = functools.partial(_disc_kernel_cond, n_classes, d_project)
        ins = [f, y2d, packed["emb"]] + weight_ins
        in_specs = ([row_spec(f), row_spec(y2d), const_spec(packed["emb"])]
                    + [const_spec(w) for w in weight_ins])
    else:
        kernel = functools.partial(_disc_kernel_uncond, d_project)
        ins = [f] + weight_ins
        in_specs = [row_spec(f)] + [const_spec(w) for w in weight_ins]

    d_slab, p1, p2 = pl.pallas_call(
        kernel,
        out_shape=out_shapes,
        grid=(n_tiles,),
        in_specs=in_specs,
        out_specs=out_specs,
        compiler_params=cparams,
    )(*ins)

    output = d_slab[:B, :1]
    project = p1[:B]
    project2 = p2[:B]
    # forward(..., projection=True, projection2=True, penultimate=True)
    aux = {"penultimate": features, "projection": project, "projection2": project2}
    return output, aux


def init_params(key, d_penul, n_classes, d_hidden, d_project):
    """Deterministic PyTorch-like init (uniform +/- 1/sqrt(fan_in)); raw f32 params."""
    ks = jax.random.split(key, 10)

    def lin(k, fan_in, fan_out):
        bound = 1.0 / jnp.sqrt(fan_in)
        kw, kb = jax.random.split(k)
        w = jax.random.uniform(kw, (fan_in, fan_out), jnp.float32, -bound, bound)
        b = jax.random.uniform(kb, (1, fan_out), jnp.float32, -bound, bound)
        return w, b

    w_lin, b_lin = lin(ks[0], d_penul, 1)
    w1, b1 = lin(ks[1], d_penul, d_hidden)
    w2, b2 = lin(ks[2], d_hidden, d_project)
    w3, b3 = lin(ks[3], d_penul, d_hidden)
    w4, b4 = lin(ks[4], d_hidden, d_project)
    emb = jax.random.normal(ks[5], (n_classes, d_penul), jnp.float32)  # nn.Embedding ~ N(0,1)

    return dict(w_lin=w_lin, b_lin=b_lin, w1=w1, b1=b1, w2=w2, b2=b2,
                w3=w3, b3=b3, w4=w4, b4=b4, emb=emb)


def pack_params(raw):
    """Pack raw params for the kernel: fused heads (bf16) + transposed scalar head."""
    d_penul, d_hidden = raw["w1"].shape
    d_project = raw["w2"].shape[1]

    w13 = jnp.concatenate([raw["w1"], raw["w3"]], axis=1).astype(jnp.bfloat16)
    b13 = jnp.concatenate([raw["b1"], raw["b3"]], axis=1).astype(jnp.float32)

    w24 = jnp.zeros((2 * d_hidden, 2 * d_project), jnp.float32)
    w24 = w24.at[:d_hidden, :d_project].set(raw["w2"])
    w24 = w24.at[d_hidden:, d_project:].set(raw["w4"])
    w24 = w24.astype(jnp.bfloat16)
    b24 = jnp.concatenate([raw["b2"], raw["b4"]], axis=1).astype(jnp.float32)

    return dict(
        w_lin_row=raw["w_lin"].T.astype(jnp.float32),   # [1, d_penul]
        b_lin=raw["b_lin"].astype(jnp.float32),         # [1, 1]
        w13=w13, b13=b13, w24=w24, b24=b24,
        emb=raw["emb"].astype(jnp.float32),
    )


if __name__ == "__main__":
    B = 2
    d_penul = 32
    n_classes = 4
    d_hidden = 128
    d_project = 128

    key = jax.random.PRNGKey(0)
    k_feat, k_y, k_par = jax.random.split(key, 3)

    features = jax.random.normal(k_feat, (B, d_penul), jnp.float32)
    y = jax.random.randint(k_y, (B,), 0, n_classes, jnp.int32)
    raw = init_params(k_par, d_penul, n_classes, d_hidden, d_project)
    packed = pack_params(raw)

    output, aux = base_discriminator_forward(features, y, packed)
    jax.block_until_ready((output, aux["projection"], aux["projection2"]))

    assert output.shape == (B, 1)
    assert aux["projection"].shape == (B, d_project)
    assert aux["projection2"].shape == (B, d_project)

    # Unconditional (y=None) variant also compiles/runs (no zeros DMA).
    output_u, _ = base_discriminator_forward(features, None, packed)
    jax.block_until_ready(output_u)
    assert output_u.shape == (B, 1)

    # --- Pure-JAX f32 reference (original module semantics) ---
    f = features
    w_y = jnp.take(raw["emb"], y, axis=0)
    d_ref = f @ raw["w_lin"] + raw["b_lin"] + jnp.sum(f * w_y, 1, keepdims=True)
    z1 = f @ raw["w1"] + raw["b1"]
    h1 = jnp.where(z1 >= 0, z1, 0.1 * z1)
    p1_ref = h1 @ raw["w2"] + raw["b2"]
    z2 = f @ raw["w3"] + raw["b3"]
    h2 = jnp.where(z2 >= 0, z2, 0.1 * z2)
    p2_ref = h2 @ raw["w4"] + raw["b4"]
    d_ref = d_ref + (p1_ref.mean() + p2_ref.mean()) * 0.0
    d_uncond_ref = f @ raw["w_lin"] + raw["b_lin"]

    # Scalar head is f32 end-to-end in the kernel -> tight tolerance.
    assert jnp.allclose(output, d_ref, atol=1e-4), "scalar head mismatch"
    assert jnp.allclose(output_u, d_uncond_ref, atol=1e-4), "uncond scalar head mismatch"
    # Projection heads use bf16 MXU inputs with f32 accumulation -> looser tolerance.
    assert jnp.allclose(aux["projection"], p1_ref, atol=5e-2), "projection mismatch"
    assert jnp.allclose(aux["projection2"], p2_ref, atol=5e-2), "projection2 mismatch"

    print("KERNEL_OK")
</pallas_src>

<mosaic_0001>
module attributes {stable_mosaic.version = 11 : i64} {
  func.func @_disc_kernel_cond(%arg0: i32, %arg1: memref<8x32xf32, #tpu.memory_space<vmem>>, %arg2: memref<8x1xi32, #tpu.memory_space<vmem>>, %arg3: memref<4x32xf32, #tpu.memory_space<vmem>>, %arg4: memref<1x32xf32, #tpu.memory_space<vmem>>, %arg5: memref<1x1xf32, #tpu.memory_space<vmem>>, %arg6: memref<32x256xbf16, #tpu.memory_space<vmem>>, %arg7: memref<1x256xf32, #tpu.memory_space<vmem>>, %arg8: memref<256x256xbf16, #tpu.memory_space<vmem>>, %arg9: memref<1x256xf32, #tpu.memory_space<vmem>>, %arg10: memref<8x128xf32, #tpu.memory_space<vmem>>, %arg11: memref<8x128xf32, #tpu.memory_space<vmem>>, %arg12: memref<8x128xf32, #tpu.memory_space<vmem>>) attributes {dimension_semantics = [#tpu.dimension_semantics<parallel>], iteration_bounds = array<i64: 1>, scalar_prefetch = 0 : i64, scratch_operands = 0 : i64, tpu.core_type = #tpu.core_type<tc>, window_params = [{transform_indices = @transform_0, window_bounds = array<i64: 8, 32>}, {transform_indices = @transform_1, window_bounds = array<i64: 8, 1>}, {pipeline_mode = #tpu.pipeline_mode<synchronous>, transform_indices = @transform_2, window_bounds = array<i64: 4, 32>}, {pipeline_mode = #tpu.pipeline_mode<synchronous>, transform_indices = @transform_3, window_bounds = array<i64: 1, 32>}, {pipeline_mode = #tpu.pipeline_mode<synchronous>, transform_indices = @transform_4, window_bounds = array<i64: 1, 1>}, {pipeline_mode = #tpu.pipeline_mode<synchronous>, transform_indices = @transform_5, window_bounds = array<i64: 32, 256>}, {pipeline_mode = #tpu.pipeline_mode<synchronous>, transform_indices = @transform_6, window_bounds = array<i64: 1, 256>}, {pipeline_mode = #tpu.pipeline_mode<synchronous>, transform_indices = @transform_7, window_bounds = array<i64: 256, 256>}, {pipeline_mode = #tpu.pipeline_mode<synchronous>, transform_indices = @transform_8, window_bounds = array<i64: 1, 256>}, {transform_indices = @transform_9, window_bounds = array<i64: 8, 128>}, {transform_indices = @transform_10, window_bounds = array<i64: 8, 128>}, {transform_indices = @transform_11, window_bounds = array<i64: 8, 128>}]} {
    %c0 = arith.constant 0 : index
    %c0_0 = arith.constant 0 : index
    %0 = vector.load %arg1[%c0, %c0_0] : memref<8x32xf32, #tpu.memory_space<vmem>>, vector<8x32xf32>
    %c0_1 = arith.constant 0 : index
    %c0_2 = arith.constant 0 : index
    %1 = vector.load %arg2[%c0_1, %c0_2] : memref<8x1xi32, #tpu.memory_space<vmem>>, vector<8x1xi32>
    %2 = tpu.iota {dimensions = array<i32: 1>} : vector<8x4xi32>
    %3 = vector.broadcast %1 : vector<8x1xi32> to vector<8x4xi32>
    %4 = arith.cmpi eq, %2, %3 : vector<8x4xi32>
    %5 = arith.extui %4 : vector<8x4xi1> to vector<8x4xi32>
    %6 = arith.sitofp %5 : vector<8x4xi32> to vector<8x4xf32>
    %c0_3 = arith.constant 0 : index
    %c0_4 = arith.constant 0 : index
    %7 = vector.load %arg3[%c0_3, %c0_4] : memref<4x32xf32, #tpu.memory_space<vmem>>, vector<4x32xf32>
    %cst = arith.constant dense<0.000000e+00> : vector<8x32xf32>
    %8 = tpu.matmul %6, %7, %cst {dimension_numbers = #tpu.dot_dimension_numbers<[1], [0], [0], [1], [0, 0, 1, 1], [], []>} : vector<8x4xf32>, vector<4x32xf32>, vector<8x32xf32> -> vector<8x32xf32>
    %c0_5 = arith.constant 0 : index
    %c0_6 = arith.constant 0 : index
    %9 = vector.load %arg4[%c0_5, %c0_6] : memref<1x32xf32, #tpu.memory_space<vmem>>, vector<1x32xf32>
    %10 = vector.broadcast %9 : vector<1x32xf32> to vector<8x32xf32>
    %11 = arith.addf %10, %8 : vector<8x32xf32>
    %12 = arith.mulf %0, %11 : vector<8x32xf32>
    %cst_7 = arith.constant dense<0.000000e+00> : vector<8xf32>
    %13 = vector.multi_reduction <add>, %12, %cst_7 [1] : vector<8x32xf32> to vector<8xf32>
    %14 = vector.shape_cast %13 : vector<8xf32> to vector<8x1xf32>
    %c0_8 = arith.constant 0 : index
    %c0_9 = arith.constant 0 : index
    %15 = vector.load %arg5[%c0_8, %c0_9] : memref<1x1xf32, #tpu.memory_space<vmem>>, vector<1x1xf32>
    %16 = vector.broadcast %15 : vector<1x1xf32> to vector<8x1xf32>
    %17 = arith.addf %14, %16 : vector<8x1xf32>
    %18 = vector.shape_cast %17 : vector<8x1xf32> to vector<8x1xf32>
    %19 = vector.broadcast %18 : vector<8x1xf32> to vector<8x128xf32>
    %c0_10 = arith.constant 0 : index
    %c0_11 = arith.constant 0 : index
    %20 = vector.load %arg10[%c0_10, %c0_11] : memref<8x128xf32, #tpu.memory_space<vmem>>, vector<8x128xf32>
    tpu.vector_store %arg10[%c0_10, %c0_11], %19 {strides = array<i32>} : memref<8x128xf32, #tpu.memory_space<vmem>>, vector<8x128xf32>,
    %c0_12 = arith.constant 0 : index
    %c0_13 = arith.constant 0 : index
    %21 = vector.load %arg6[%c0_12, %c0_13] : memref<32x256xbf16, #tpu.memory_space<vmem>>, vector<32x256xbf16>
    %c0_14 = arith.constant 0 : index
    %c0_15 = arith.constant 0 : index
    %22 = vector.load %arg7[%c0_14, %c0_15] : memref<1x256xf32, #tpu.memory_space<vmem>>, vector<1x256xf32>
    %c0_16 = arith.constant 0 : index
    %c0_17 = arith.constant 0 : index
    %23 = vector.load %arg8[%c0_16, %c0_17] : memref<256x256xbf16, #tpu.memory_space<vmem>>, vector<256x256xbf16>
    %c0_18 = arith.constant 0 : index
    %c0_19 = arith.constant 0 : index
    %24 = vector.load %arg9[%c0_18, %c0_19] : memref<1x256xf32, #tpu.memory_space<vmem>>, vector<1x256xf32>
    %25 = arith.truncf %0 : vector<8x32xf32> to vector<8x32xbf16>
    %cst_20 = arith.constant dense<0.000000e+00> : vector<8x256xf32>
    %26 = tpu.matmul %25, %21, %cst_20 {dimension_numbers = #tpu.dot_dimension_numbers<[1], [0], [0], [1], [0, 0, 1, 1], [], []>} : vector<8x32xbf16>, vector<32x256xbf16>, vector<8x256xf32> -> vector<8x256xf32>
    %27 = vector.broadcast %22 : vector<1x256xf32> to vector<8x256xf32>
    %28 = arith.addf %26, %27 : vector<8x256xf32>
    %cst_21 = arith.constant 0.000000e+00 : f32
    %29 = vector.broadcast %cst_21 : f32 to vector<8x256xf32>
    %30 = arith.cmpf oge, %28, %29 : vector<8x256xf32>
    %cst_22 = arith.constant 1.000000e-01 : f32
    %31 = vector.broadcast %cst_22 : f32 to vector<8x256xf32>
    %32 = arith.mulf %31, %28 : vector<8x256xf32>
    %33 = arith.select %30, %28, %32 : vector<8x256xi1>, vector<8x256xf32>
    %34 = arith.truncf %33 : vector<8x256xf32> to vector<8x256xbf16>
    %cst_23 = arith.constant dense<0.000000e+00> : vector<8x256xf32>
    %35 = tpu.matmul %34, %23, %cst_23 {dimension_numbers = #tpu.dot_dimension_numbers<[1], [0], [0], [1], [0, 0, 1, 1], [], []>} : vector<8x256xbf16>, vector<256x256xbf16>, vector<8x256xf32> -> vector<8x256xf32>
    %36 = vector.broadcast %24 : vector<1x256xf32> to vector<8x256xf32>
    %37 = arith.addf %35, %36 : vector<8x256xf32>
    %38 = vector.extract_strided_slice %37 {offsets = [0, 0], sizes = [8, 128], strides = [1, 1]} : vector<8x256xf32> to vector<8x128xf32>
    %39 = vector.extract_strided_slice %37 {offsets = [0, 128], sizes = [8, 128], strides = [1, 1]} : vector<8x256xf32> to vector<8x128xf32>
    %c0_24 = arith.constant 0 : index
    %c0_25 = arith.constant 0 : index
    %40 = vector.load %arg11[%c0_24, %c0_25] : memref<8x128xf32, #tpu.memory_space<vmem>>, vector<8x128xf32>
    tpu.vector_store %arg11[%c0_24, %c0_25], %38 {strides = array<i32>} : memref<8x128xf32, #tpu.memory_space<vmem>>, vector<8x128xf32>,
    %c0_26 = arith.constant 0 : index
    %c0_27 = arith.constant 0 : index
    %41 = vector.load %arg12[%c0_26, %c0_27] : memref<8x128xf32, #tpu.memory_space<vmem>>, vector<8x128xf32>
    tpu.vector_store %arg12[%c0_26, %c0_27], %39 {strides = array<i32>} : memref<8x128xf32, #tpu.memory_space<vmem>>, vector<8x128xf32>,
    return
  }
  func.func @transform_0(%arg0: i32) -> (i32, i32) {
    %c0_i32 = arith.constant 0 : i32
    %c0_i32_0 = arith.constant 0 : i32
    return %arg0, %c0_i32 : i32, i32
  }
  func.func @transform_1(%arg0: i32) -> (i32, i32) {
    %c0_i32 = arith.constant 0 : i32
    %c0_i32_0 = arith.constant 0 : i32
    return %arg0, %c0_i32 : i32, i32
  }
  func.func @transform_2(%arg0: i32) -> (i32, i32) {
    %c0_i32 = arith.constant 0 : i32
    %c0_i32_0 = arith.constant 0 : i32
    %c0_i32_1 = arith.constant 0 : i32
    return %c0_i32, %c0_i32_0 : i32, i32
  }
  func.func @transform_3(%arg0: i32) -> (i32, i32) {
    %c0_i32 = arith.constant 0 : i32
    %c0_i32_0 = arith.constant 0 : i32
    %c0_i32_1 = arith.constant 0 : i32
    return %c0_i32, %c0_i32_0 : i32, i32
  }
  func.func @transform_4(%arg0: i32) -> (i32, i32) {
    %c0_i32 = arith.constant 0 : i32
    %c0_i32_0 = arith.constant 0 : i32
    %c0_i32_1 = arith.constant 0 : i32
    return %c0_i32, %c0_i32_0 : i32, i32
  }
  func.func @transform_5(%arg0: i32) -> (i32, i32) {
    %c0_i32 = arith.constant 0 : i32
    %c0_i32_0 = arith.constant 0 : i32
    %c0_i32_1 = arith.constant 0 : i32
    return %c0_i32, %c0_i32_0 : i32, i32
  }
  func.func @transform_6(%arg0: i32) -> (i32, i32) {
    %c0_i32 = arith.constant 0 : i32
    %c0_i32_0 = arith.constant 0 : i32
    %c0_i32_1 = arith.constant 0 : i32
    return %c0_i32, %c0_i32_0 : i32, i32
  }
  func.func @transform_7(%arg0: i32) -> (i32, i32) {
    %c0_i32 = arith.constant 0 : i32
    %c0_i32_0 = arith.constant 0 : i32
    %c0_i32_1 = arith.constant 0 : i32
    return %c0_i32, %c0_i32_0 : i32, i32
  }
  func.func @transform_8(%arg0: i32) -> (i32, i32) {
    %c0_i32 = arith.constant 0 : i32
    %c0_i32_0 = arith.constant 0 : i32
    %c0_i32_1 = arith.constant 0 : i32
    return %c0_i32, %c0_i32_0 : i32, i32
  }
  func.func @transform_9(%arg0: i32) -> (i32, i32) {
    %c0_i32 = arith.constant 0 : i32
    %c0_i32_0 = arith.constant 0 : i32
    return %arg0, %c0_i32 : i32, i32
  }
  func.func @transform_10(%arg0: i32) -> (i32, i32) {
    %c0_i32 = arith.constant 0 : i32
    %c0_i32_0 = arith.constant 0 : i32
    return %arg0, %c0_i32 : i32, i32
  }
  func.func @transform_11(%arg0: i32) -> (i32, i32) {
    %c0_i32 = arith.constant 0 : i32
    %c0_i32_0 = arith.constant 0 : i32
    return %arg0, %c0_i32 : i32, i32
  }
}

</mosaic_0001>

<llo_original>
// kernel: tpu_custom_call.1
$region0: #{tpu_custom_call.1}
  #allocation0 [shape = 'u32[]', space=smem, size = 0x4, offset = 0x4, fixed_abs, tag = 'smem constant byte address 0x4 - core index']
  #allocation1 [shape = 'u32[144,128]{1,0:T(1,128)}', space=vmem, size = 0x12000, scoped, tag = 'internal scratch']
  #allocation2 [shape = 'f32[1,1]{1,0:T(1,128)S(1)}', space=vmem, size = 0x200, scoped, tag = 'scoped memory for tpu_custom_call.1']
  %s0 = inlined_call_operand.vmem [shape: f32[8,32], index: 0, kind: input, shape index: {}]
  %s1 = inlined_call_operand.vmem [shape: s32[8,1], index: 1, kind: input, shape index: {}]
  %s2 = inlined_call_operand.vmem [shape: f32[4,32], index: 2, kind: input, shape index: {}]
  %s3 = inlined_call_operand.vmem [shape: f32[1,32], index: 3, kind: input, shape index: {}]
  %s4 = inlined_call_operand.<no memory space> [shape: f32[1,1], index: 4, kind: input, shape index: {}]
  %s5 = inlined_call_operand.hbm [shape: bf16[32,256], index: 5, kind: input, shape index: {}]
  %s6 = inlined_call_operand.vmem [shape: f32[1,256], index: 6, kind: input, shape index: {}]
  %s7 = inlined_call_operand.hbm [shape: bf16[256,256], index: 7, kind: input, shape index: {}]
  %s8 = inlined_call_operand.vmem [shape: f32[1,256], index: 8, kind: input, shape index: {}]
  %s9 = inlined_call_operand.hbm [shape: f32[8,128], index: 9, kind: output, shape index: {0}]
  %s10 = inlined_call_operand.hbm [shape: f32[8,128], index: 10, kind: output, shape index: {1}]
  %s11 = inlined_call_operand.hbm [shape: f32[8,128], index: 11, kind: output, shape index: {2}]
  %12 = xla_tuple %s9, %s10, %s11
  %s13 = sld [smem:[#allocation0]]
  $region70: #{tpu_custom_call.1} parent=0
    _
  %s15 = ssub.s32 1, %s13
  %s16 = scalar_select 0, %s15, %s13
  %v17 = vstv %s4
  %18 = vst [vmem:[#allocation2] sm:$0x1] %v17
  $region1: #{tpu_custom_call.1} parent=0
    #allocation3 [shape = 'u8[16384]{0}', space=vmem, size = 0x4000, scoped, tag = 'input window, operand 5, single buffered']
    #allocation4 [shape = 's32[1]{0}', space=sflag, size = 0x4, scoped, tag = 'scoped memory for tpu_custom_call.1']
    #allocation5 [shape = 's32[1]{0}', space=sflag, size = 0x4, scoped, tag = 'scoped memory for tpu_custom_call.1']
    #allocation6 [shape = 'u8[131072]{0}', space=vmem, size = 0x20000, scoped, tag = 'input window, operand 7, single buffered']
    #allocation7 [shape = 's32[1]{0}', space=sflag, size = 0x4, scoped, tag = 'scoped memory for tpu_custom_call.1']
    #allocation8 [shape = 'u8[4096]{0}', space=vmem, size = 0x1000, scoped, tag = 'output window, operand 0, single buffered']
    #allocation9 [shape = 'u8[4096]{0}', space=vmem, size = 0x1000, scoped, tag = 'output window, operand 1, single buffered']
    #allocation10 [shape = 's32[1]{0}', space=sflag, size = 0x4, scoped, tag = 'scoped memory for tpu_custom_call.1']
    #allocation11 [shape = 'u8[4096]{0}', space=vmem, size = 0x1000, scoped, tag = 'output window, operand 2, single buffered']
    %19 = vsyncpa [#allocation4], 0
    %20 = vsyncpa [#allocation7], 0
    %21 = vsyncpa [#allocation5], 0
    %22 = vsyncpa [#allocation10], 0
    // Predicated region
    $region2: #{tpu_custom_call.1} parent=1 // pred_check
      _
    $region3: #{tpu_custom_call.1} parent=1 // pred_check_branch
      %24 = sbr.rel (0) target = $region5
    $region4: #{tpu_custom_call.1} parent=1 // pred_region
      _
    $region5: #{tpu_custom_call.1} parent=1 // pred_fallthru
      _
    // Predicated region
    $region6: #{tpu_custom_call.1} parent=1 // pred_check
      _
    $region7: #{tpu_custom_call.1} parent=1 // pred_check_branch
      %26 = sbr.rel (0) target = $region9
    $region8: #{tpu_custom_call.1} parent=1 // pred_region
      _
    $region9: #{tpu_custom_call.1} parent=1 // pred_fallthru
      _
    // Predicated region
    $region10: #{tpu_custom_call.1} parent=1 // pred_check
      _
    $region11: #{tpu_custom_call.1} parent=1 // pred_check_branch
      %28 = sbr.rel (0) target = $region13
    $region12: #{tpu_custom_call.1} parent=1 // pred_region
      _
    $region13: #{tpu_custom_call.1} parent=1 // pred_fallthru
      _
    // Predicated region
    $region14: #{tpu_custom_call.1} parent=1 // pred_check
      _
    $region15: #{tpu_custom_call.1} parent=1 // pred_check_branch
      %30 = sbr.rel (0) target = $region17
    $region16: #{tpu_custom_call.1} parent=1 // pred_region
      _
    $region17: #{tpu_custom_call.1} parent=1 // pred_fallthru
      _
    // Predicated region
    $region18: #{tpu_custom_call.1} parent=1 // pred_check
      _
    $region19: #{tpu_custom_call.1} parent=1 // pred_check_branch
      %32 = sbr.rel (0) target = $region21
    $region20: #{tpu_custom_call.1} parent=1 // pred_region
      _
    $region21: #{tpu_custom_call.1} parent=1 // pred_fallthru
      _
    // Predicated region
    $region22: #{tpu_custom_call.1} parent=1 // pred_check
      _
    $region23: #{tpu_custom_call.1} parent=1 // pred_check_branch
      %34 = sbr.rel (0) target = $region25
    $region24: #{tpu_custom_call.1} parent=1 // pred_region
      %s36 = ssub.s32 512, 512
      %37 = vsyncadd [#allocation4], %s36
      %s38 = sshll.u32 [#allocation3], 4
      %s39 = int_to_ptr.vmem [resolvable:$true] %s38
      %44 = dma.hbm_to_vmem [thread:$0]  %s5, 512, %s39, [#allocation4], 128, 128, 8
    $region25: #{tpu_custom_call.1} parent=1 // pred_fallthru
      _
    // Predicated region
    $region26: #{tpu_custom_call.1} parent=1 // pred_check
      _
    $region27: #{tpu_custom_call.1} parent=1 // pred_check_branch
      %46 = sbr.rel (0) target = $region29
    $region28: #{tpu_custom_call.1} parent=1 // pred_region
      _
    $region29: #{tpu_custom_call.1} parent=1 // pred_fallthru
      _
    // Predicated region
    $region30: #{tpu_custom_call.1} parent=1 // pred_check
      _
    $region31: #{tpu_custom_call.1} parent=1 // pred_check_branch
      %48 = sbr.rel (0) target = $region33
    $region32: #{tpu_custom_call.1} parent=1 // pred_region
      %s50 = ssub.s32 4096, 4096
      %51 = vsyncadd [#allocation7], %s50
      %s52 = sshll.u32 [#allocation6], 4
      %s53 = int_to_ptr.vmem [resolvable:$true] %s52
      %58 = dma.hbm_to_vmem [thread:$0]  %s7, 4096, %s53, [#allocation7], 128, 128, 8
    $region33: #{tpu_custom_call.1} parent=1 // pred_fallthru
      _
    // Predicated region
    $region34: #{tpu_custom_call.1} parent=1 // pred_check
      _
    $region35: #{tpu_custom_call.1} parent=1 // pred_check_branch
      %60 = sbr.rel (0) target = $region37
    $region36: #{tpu_custom_call.1} parent=1 // pred_region
      _
    $region37: #{tpu_custom_call.1} parent=1 // pred_fallthru
      _
    // Predicated region
    $region38: #{tpu_custom_call.1} parent=1 // pred_check
      _
    $region39: #{tpu_custom_call.1} parent=1 // pred_check_branch
      %62 = sbr.rel (0) target = $region41
    $region40: #{tpu_custom_call.1} parent=1 // pred_region
      %63 = dma.done [#allocation4], 512
    $region41: #{tpu_custom_call.1} parent=1 // pred_fallthru
      _
    // Predicated region
    $region42: #{tpu_custom_call.1} parent=1 // pred_check
      _
    $region43: #{tpu_custom_call.1} parent=1 // pred_check_branch
      %65 = sbr.rel (0) target = $region45
    $region44: #{tpu_custom_call.1} parent=1 // pred_region
      %66 = dma.done [#allocation7], 4096
    $region45: #{tpu_custom_call.1} parent=1 // pred_fallthru
      _
    %v68 = vld [vmem:[%s0] sm:$0xff]
    %v69 = vld [vmem:[%s1] sm:$0xff]
    %v70 = vlaneseq
    %v71 = vand.u32 %v70, 127
    %72 = vset.pattern.permute.xlu0 0
    %73 = vperm.xlu0 %72, %v69
    %v74 = vpop.permute.xlu0 %73
    %vm75 = vcmp.eq.s32.totalorder %v71, %v74
    %v76 = vsel %vm75, 1, 0
    %v77 = vcvt.s32.f32 %v76
    %v78 = vld [vmem:[%s2] sm:$0xf]
    %vm79 = vcmask 31744
    %v81 = vsel %vm79, %v77, 0
    %vm83 = vcmask 1043456
    %v85 = vsel %vm83, %v78, 0
    %87 = vmatprep.subr.mxu0 0.0
    %88 = vmatpush1.msra.mxu0 %v85
    %89 = vmatprep.subr.mxu0 0.0
    %90 = vmatpush1.msra.mxu0 0.0
    %91 = vmatprep.subr.mxu0 0.0
    %92 = vmatpush1.msra.mxu0 0.0
    %93 = vmatprep.subr.mxu0 0.0
    %94 = vmatpush1.msra.mxu0 0.0
    %95 = vmatprep.subr.mxu0 0.0
    %96 = vmatpush1.msra.mxu0 0.0
    %97 = vmatprep.subr.mxu0 0.0
    %98 = vmatpush1.msra.mxu0 0.0
    %99 = vmatprep.subr.mxu0 0.0
    %100 = vmatpush1.msra.mxu0 0.0
    %101 = vmatprep.subr.mxu0 0.0
    %102 = vmatpush1.msra.mxu0 0.0
    %103 = vmatprep.subr.mxu0 0.0
    %104 = vmatpush1.msra.mxu0 0.0
    %105 = vmatprep.subr.mxu0 0.0
    %106 = vmatpush1.msra.mxu0 0.0
    %107 = vmatprep.subr.mxu0 0.0
    %108 = vmatpush1.msra.mxu0 0.0
    %109 = vmatprep.subr.mxu0 0.0
    %110 = vmatpush1.msra.mxu0 0.0
    %111 = vmatprep.subr.mxu0 0.0
    %112 = vmatpush1.msra.mxu0 0.0
    %113 = vmatprep.subr.mxu0 0.0
    %114 = vmatpush1.msra.mxu0 0.0
    %115 = vmatprep.subr.mxu0 0.0
    %116 = vmatpush1.msra.mxu0 0.0
    %117 = vmatprep.subr.mxu0 0.0
    %118 = vmatpush1.msra.mxu0 0.0
    %119 = vmatprep.subr.mxu0 0.0
    %120 = vmatpush1.msra.mxu0 0.0
    %121 = vmatprep.subr.mxu0 0.0
    %122 = vmatpush1.msra.mxu0 0.0
    %123 = vmatprep.subr.mxu0 0.0
    %124 = vmatpush1.msra.mxu0 0.0
    %125 = vmatprep.subr.mxu0 0.0
    %126 = vmatpush1.msra.mxu0 0.0
    %127 = vmatprep.subr.mxu0 0.0
    %128 = vmatpush1.msra.mxu0 0.0
    %129 = vmatprep.subr.mxu0 0.0
    %130 = vmatpush1.msra.mxu0 0.0
    %131 = vmatprep.subr.mxu0 0.0
    %132 = vmatpush1.msra.mxu0 0.0
    %133 = vmatprep.subr.mxu0 0.0
    %134 = vmatpush1.msra.mxu0 0.0
    %135 = vmatprep.subr.mxu0 0.0
    %136 = vmatpush1.msra.mxu0 0.0
    %137 = vmatprep.subr.mxu0 0.0
    %138 = vmatpush1.msra.mxu0 0.0
    %139 = vmatprep.subr.mxu0 0.0
    %140 = vmatpush1.msra.mxu0 0.0
    %141 = vmatprep.subr.mxu0 0.0
    %142 = vmatpush1.msra.mxu0 0.0
    %143 = vmatprep.subr.mxu0 0.0
    %144 = vmatpush1.msra.mxu0 0.0
    %145 = vmatprep.subr.mxu0 0.0
    %146 = vmatpush1.msra.mxu0 0.0
    %147 = vmatprep.subr.mxu0 0.0
    %148 = vmatpush1.msra.mxu0 0.0
    %149 = vmatprep.subr.mxu0 0.0
    %150 = vmatpush1.msra.mxu0 0.0
    %151 = vmatprep.mubr.f32.mxu0 0.0
    %152 = vmatmul.mubr.f32.gmra.mrb[0].mxu0 %v81
    %v153 = vpop.f32.mrb[0].mxu0
    %v154 = vadd.f32 0.0, %v153
    %v155 = vpop.f32.mrb[0].mxu0
    %156 = vdwg.mxu0
    %v157 = vld [vmem:[%s3] sm:$0x1]
    %v159 = vlaneseq
    %v160 = vshrl.u32 %v159, 7
    %v161 = vsub.s32 0, %v160
    %v162 = vrot.slane %v157, %v161
    %v164 = vadd.f32 %v162, %v154
    %v165 = vmul.f32 %v68, %v164
    %vm166 = vcmask 261120
    %v167 = vsel %vm166, %v165, 0.0
    %168 = vadd.xlane.f32.xlu0 %v167
    %v169 = vpop.xlane.xlu0 %168
    %v170 = vld [vmem:[#allocation2] sm:$0x1]
    %v172 = vlaneseq
    %v173 = vshrl.u32 %v172, 7
    %v174 = vsub.s32 0, %v173
    %v175 = vrot.slane %v170, %v174
    %v177 = vadd.f32 %v169, %v175
    %179 = vset.pattern.permute.xlu0 0
    %180 = vperm.xlu0 %179, %v177
    %v181 = vpop.permute.xlu0 %180
    %183 = vst [vmem:[#allocation8] sm:$0xff] %v181
    %v184 = vld [vmem:[#allocation3] sm:$0xff]
    %v185 = vld [vmem:[#allocation3 + $0x8] sm:$0xff]
    %v186 = vld [vmem:[#allocation3 + $0x10] sm:$0xff]
    %v187 = vld [vmem:[#allocation3 + $0x18] sm:$0xff]
    %v188 = vld [vmem:[%s6] sm:$0x3]
    %v189 = vld [vmem:[#allocation6] sm:$0xff]
    %v190 = vld [vmem:[#allocation6 + $0x8] sm:$0xff]
    %v191 = vld [vmem:[#allocation6 + $0x10] sm:$0xff]
    %v192 = vld [vmem:[#allocation6 + $0x18] sm:$0xff]
    %v193 = vld [vmem:[#allocation6 + $0x20] sm:$0xff]
    %v194 = vld [vmem:[#allocation6 + $0x28] sm:$0xff]
    %v195 = vld [vmem:[#allocation6 + $0x30] sm:$0xff]
    %v196 = vld [vmem:[#allocation6 + $0x38] sm:$0xff]
    %v197 = vld [vmem:[#allocation6 + $0x40] sm:$0xff]
    %v198 = vld [vmem:[#allocation6 + $0x48] sm:$0xff]
    %v199 = vld [vmem:[#allocation6 + $0x50] sm:$0xff]
    %v200 = vld [vmem:[#allocation6 + $0x58] sm:$0xff]
    %v201 = vld [vmem:[#allocation6 + $0x60] sm:$0xff]
    %v202 = vld [vmem:[#allocation6 + $0x68] sm:$0xff]
    %v203 = vld [vmem:[#allocation6 + $0x70] sm:$0xff]
    %v204 = vld [vmem:[#allocation6 + $0x78] sm:$0xff]
    %v205 = vld [vmem:[#allocation6 + $0x80] sm:$0xff]
    %v206 = vld [vmem:[#allocation6 + $0x88] sm:$0xff]
    %v207 = vld [vmem:[#allocation6 + $0x90] sm:$0xff]
    %v208 = vld [vmem:[#allocation6 + $0x98] sm:$0xff]
    %v209 = vld [vmem:[#allocation6 + $0xa0] sm:$0xff]
    %v210 = vld [vmem:[#allocation6 + $0xa8] sm:$0xff]
    %v211 = vld [vmem:[#allocation6 + $0xb0] sm:$0xff]
    %v212 = vld [vmem:[#allocation6 + $0xb8] sm:$0xff]
    %v213 = vld [vmem:[#allocation6 + $0xc0] sm:$0xff]
    %v214 = vld [vmem:[#allocation6 + $0xc8] sm:$0xff]
    %v215 = vld [vmem:[#allocation6 + $0xd0] sm:$0xff]
    %v216 = vld [vmem:[#allocation6 + $0xd8] sm:$0xff]
    %v217 = vld [vmem:[#allocation6 + $0xe0] sm:$0xff]
    %v218 = vld [vmem:[#allocation6 + $0xe8] sm:$0xff]
    %v219 = vld [vmem:[#allocation6 + $0xf0] sm:$0xff]
    %v220 = vld [vmem:[#allocation6 + $0xf8] sm:$0xff]
    %v221 = vld [vmem:[%s8] sm:$0x3]
    %v222 = vpack.c.bf16 %v68, %v68
    %v224 = vlaneseq
    %v225 = vshrl.u32 %v224, 7
    %v226 = vsub.s32 0, %v225
    %v227 = vrot.slane %v188, %v226
    %v228 = vlaneseq
    %v229 = vshrl.u32 %v228, 7
    %v230 = vsub.s32 1, %v229
    %v231 = vrot.slane %v188, %v230
    %v238 = vunpack.c.l.b16 %v184
    %v239 = vunpack.c.h.b16 %v184
    %v240 = vunpack.c.l.b16 %v185
    %v241 = vunpack.c.h.b16 %v185
    %v242 = vunpack.c.l.b16 %v186
    %v243 = vunpack.c.h.b16 %v186
    %v244 = vunpack.c.l.b16 %v187
    %v245 = vunpack.c.h.b16 %v187
    %v246 = vpack.c.b16 %v240, %v238
    %v247 = vpack.c.b16 %v241, %v239
    %v248 = vpack.c.b16 %v244, %v242
    %v249 = vpack.c.b16 %v245, %v243
    %v255 = vsel %vm166, %v222, 0
    %257 = vmatprep.subr.bf16.mxu0 %v247
    %258 = vmatpush1.bf16.msra.mxu0 %v246
    %259 = vmatprep.subr.bf16.mxu0 %v249
    %260 = vmatpush1.bf16.msra.mxu0 %v248
    %261 = vmatprep.subr.bf16.mxu0 0
    %262 = vmatpush1.bf16.msra.mxu0 0
    %263 = vmatprep.subr.bf16.mxu0 0
    %264 = vmatpush1.bf16.msra.mxu0 0
    %265 = vmatprep.subr.bf16.mxu0 0
    %266 = vmatpush1.bf16.msra.mxu0 0
    %267 = vmatprep.subr.bf16.mxu0 0
    %268 = vmatpush1.bf16.msra.mxu0 0
    %269 = vmatprep.subr.bf16.mxu0 0
    %270 = vmatpush1.bf16.msra.mxu0 0
    %271 = vmatprep.subr.bf16.mxu0 0
    %272 = vmatpush1.bf16.msra.mxu0 0
    %273 = vmatprep.subr.bf16.mxu0 0
    %274 = vmatpush1.bf16.msra.mxu0 0
    %275 = vmatprep.subr.bf16.mxu0 0
    %276 = vmatpush1.bf16.msra.mxu0 0
    %277 = vmatprep.subr.bf16.mxu0 0
    %278 = vmatpush1.bf16.msra.mxu0 0
    %279 = vmatprep.subr.bf16.mxu0 0
    %280 = vmatpush1.bf16.msra.mxu0 0
    %281 = vmatprep.subr.bf16.mxu0 0
    %282 = vmatpush1.bf16.msra.mxu0 0
    %283 = vmatprep.subr.bf16.mxu0 0
    %284 = vmatpush1.bf16.msra.mxu0 0
    %285 = vmatprep.subr.bf16.mxu0 0
    %286 = vmatpush1.bf16.msra.mxu0 0
    %287 = vmatprep.subr.bf16.mxu0 0
    %288 = vmatpush1.bf16.msra.mxu0 0
    %289 = vmatprep.mubr.bf16.mxu0 0
    %290 = vmatmul.mubr.bf16.gmra.mrb[0].mxu0 %v255
    %v291 = vpop.f32.mrb[0].mxu0
    %v292 = vadd.f32 %v227, %v291
    %v293 = vpop.f32.mrb[0].mxu0
    %v294 = vadd.f32 %v231, %v293
    %v295 = vpop.f32.mrb[0].mxu0
    %v296 = vpop.f32.mrb[0].mxu0
    %297 = vdwg.mxu0
    %vm298 = vcmp.ge.f32.partialorder %v292, 0.0
    %vm299 = vcmp.ge.f32.partialorder %v294, 0.0
    %v300 = vmul.f32 %v292, 0.1
    %v301 = vmul.f32 %v294, 0.1
    %v302 = vsel %vm298, %v292, %v300
    %v303 = vsel %vm299, %v294, %v301
    %v304 = vpack.c.bf16 %v302, %v302
    %v305 = vpack.c.bf16 %v303, %v303
    %v307 = vlaneseq
    %v308 = vshrl.u32 %v307, 7
    %v309 = vsub.s32 0, %v308
    %v310 = vrot.slane %v221, %v309
    %v311 = vlaneseq
    %v312 = vshrl.u32 %v311, 7
    %v313 = vsub.s32 1, %v312
    %v314 = vrot.slane %v221, %v313
    %v349 = vunpack.c.l.b16 %v189
    %v350 = vunpack.c.h.b16 %v189
    %v351 = vunpack.c.l.b16 %v190
    %v352 = vunpack.c.h.b16 %v190
    %v353 = vunpack.c.l.b16 %v191
    %v354 = vunpack.c.h.b16 %v191
    %v355 = vunpack.c.l.b16 %v192
    %v356 = vunpack.c.h.b16 %v192
    %v357 = vunpack.c.l.b16 %v193
    %v358 = vunpack.c.h.b16 %v193
    %v359 = vunpack.c.l.b16 %v194
    %v360 = vunpack.c.h.b16 %v194
    %v361 = vunpack.c.l.b16 %v195
    %v362 = vunpack.c.h.b16 %v195
    %v363 = vunpack.c.l.b16 %v196
    %v364 = vunpack.c.h.b16 %v196
    %v365 = vunpack.c.l.b16 %v197
    %v366 = vunpack.c.h.b16 %v197
    %v367 = vunpack.c.l.b16 %v198
    %v368 = vunpack.c.h.b16 %v198
    %v369 = vunpack.c.l.b16 %v199
    %v370 = vunpack.c.h.b16 %v199
    %v371 = vunpack.c.l.b16 %v200
    %v372 = vunpack.c.h.b16 %v200
    %v373 = vunpack.c.l.b16 %v201
    %v374 = vunpack.c.h.b16 %v201
    %v375 = vunpack.c.l.b16 %v202
    %v376 = vunpack.c.h.b16 %v202
    %v377 = vunpack.c.l.b16 %v203
    %v378 = vunpack.c.h.b16 %v203
    %v379 = vunpack.c.l.b16 %v204
    %v380 = vunpack.c.h.b16 %v204
    %v381 = vunpack.c.l.b16 %v205
    %v382 = vunpack.c.h.b16 %v205
    %v383 = vunpack.c.l.b16 %v206
    %v384 = vunpack.c.h.b16 %v206
    %v385 = vunpack.c.l.b16 %v207
    %v386 = vunpack.c.h.b16 %v207
    %v387 = vunpack.c.l.b16 %v208
    %v388 = vunpack.c.h.b16 %v208
    %v389 = vunpack.c.l.b16 %v209
    %v390 = vunpack.c.h.b16 %v209
    %v391 = vunpack.c.l.b16 %v210
    %v392 = vunpack.c.h.b16 %v210
    %v393 = vunpack.c.l.b16 %v211
    %v394 = vunpack.c.h.b16 %v211
    %v395 = vunpack.c.l.b16 %v212
    %v396 = vunpack.c.h.b16 %v212
    %v397 = vunpack.c.l.b16 %v213
    %v398 = vunpack.c.h.b16 %v213
    %v399 = vunpack.c.l.b16 %v214
    %v400 = vunpack.c.h.b16 %v214
    %v401 = vunpack.c.l.b16 %v215
    %v402 = vunpack.c.h.b16 %v215
    %v403 = vunpack.c.l.b16 %v216
    %v404 = vunpack.c.h.b16 %v216
    %v405 = vunpack.c.l.b16 %v217
    %v406 = vunpack.c.h.b16 %v217
    %v407 = vunpack.c.l.b16 %v218
    %v408 = vunpack.c.h.b16 %v218
    %v409 = vunpack.c.l.b16 %v219
    %v410 = vunpack.c.h.b16 %v219
    %v411 = vunpack.c.l.b16 %v220
    %v412 = vunpack.c.h.b16 %v220
    %v413 = vpack.c.b16 %v351, %v349
    %v414 = vpack.c.b16 %v352, %v350
    %v415 = vpack.c.b16 %v355, %v353
    %v416 = vpack.c.b16 %v356, %v354
    %v417 = vpack.c.b16 %v359, %v357
    %v418 = vpack.c.b16 %v360, %v358
    %v419 = vpack.c.b16 %v363, %v361
    %v420 = vpack.c.b16 %v364, %v362
    %v421 = vpack.c.b16 %v367, %v365
    %v422 = vpack.c.b16 %v368, %v366
    %v423 = vpack.c.b16 %v371, %v369
    %v424 = vpack.c.b16 %v372, %v370
    %v425 = vpack.c.b16 %v375, %v373
    %v426 = vpack.c.b16 %v376, %v374
    %v427 = vpack.c.b16 %v379, %v377
    %v428 = vpack.c.b16 %v380, %v378
    %v429 = vpack.c.b16 %v383, %v381
    %v430 = vpack.c.b16 %v384, %v382
    %v431 = vpack.c.b16 %v387, %v385
    %v432 = vpack.c.b16 %v388, %v386
    %v433 = vpack.c.b16 %v391, %v389
    %v434 = vpack.c.b16 %v392, %v390
    %v435 = vpack.c.b16 %v395, %v393
    %v436 = vpack.c.b16 %v396, %v394
    %v437 = vpack.c.b16 %v399, %v397
    %v438 = vpack.c.b16 %v400, %v398
    %v439 = vpack.c.b16 %v403, %v401
    %v440 = vpack.c.b16 %v404, %v402
    %v441 = vpack.c.b16 %v407, %v405
    %v442 = vpack.c.b16 %v408, %v406
    %v443 = vpack.c.b16 %v411, %v409
    %v444 = vpack.c.b16 %v412, %v410
    %477 = vmatprep.subr.bf16.mxu0 %v414
    %478 = vmatpush1.bf16.msra.mxu0 %v413
    %479 = vmatprep.subr.bf16.mxu0 %v416
    %480 = vmatpush1.bf16.msra.mxu0 %v415
    %481 = vmatprep.subr.bf16.mxu0 %v418
    %482 = vmatpush1.bf16.msra.mxu0 %v417
    %483 = vmatprep.subr.bf16.mxu0 %v420
    %484 = vmatpush1.bf16.msra.mxu0 %v419
    %485 = vmatprep.subr.bf16.mxu0 %v422
    %486 = vmatpush1.bf16.msra.mxu0 %v421
    %487 = vmatprep.subr.bf16.mxu0 %v424
    %488 = vmatpush1.bf16.msra.mxu0 %v423
    %489 = vmatprep.subr.bf16.mxu0 %v426
    %490 = vmatpush1.bf16.msra.mxu0 %v425
    %491 = vmatprep.subr.bf16.mxu0 %v428
    %492 = vmatpush1.bf16.msra.mxu0 %v427
    %493 = vmatprep.subr.bf16.mxu0 %v430
    %494 = vmatpush1.bf16.msra.mxu0 %v429
    %495 = vmatprep.subr.bf16.mxu0 %v432
    %496 = vmatpush1.bf16.msra.mxu0 %v431
    %497 = vmatprep.subr.bf16.mxu0 %v434
    %498 = vmatpush1.bf16.msra.mxu0 %v433
    %499 = vmatprep.subr.bf16.mxu0 %v436
    %500 = vmatpush1.bf16.msra.mxu0 %v435
    %501 = vmatprep.subr.bf16.mxu0 %v438
    %502 = vmatpush1.bf16.msra.mxu0 %v437
    %503 = vmatprep.subr.bf16.mxu0 %v440
    %504 = vmatpush1.bf16.msra.mxu0 %v439
    %505 = vmatprep.subr.bf16.mxu0 %v442
    %506 = vmatpush1.bf16.msra.mxu0 %v441
    %507 = vmatprep.subr.bf16.mxu0 %v444
    %508 = vmatpush1.bf16.msra.mxu0 %v443
    %509 = vmatprep.mubr.bf16.mxu0 %v305
    %510 = vmatmul.mubr.bf16.gmra.mrb[0].mxu0 %v304
    %v511 = vpop.f32.mrb[0].mxu0
    %v512 = vadd.f32 %v310, %v511
    %v513 = vpop.f32.mrb[0].mxu0
    %v514 = vadd.f32 %v314, %v513
    %v515 = vpop.f32.mrb[0].mxu0
    %v516 = vpop.f32.mrb[0].mxu0
    %517 = vdwg.mxu0
    %518 = vst [vmem:[#allocation9] sm:$0xff] %v512
    %519 = vst [vmem:[#allocation11] sm:$0xff] %v514
    // Predicated region
    $region46: #{tpu_custom_call.1} parent=1 // pred_check
      _
    $region47: #{tpu_custom_call.1} parent=1 // pred_check_branch
      %521 = sbr.rel (0) target = $region49
    $region48: #{tpu_custom_call.1} parent=1 // pred_region
      %s523 = ssub.s32 128, 128
      %524 = vsyncadd [#allocation5], %s523
      %s526 = sshll.u32 [#allocation8], 4
      %s527 = int_to_ptr.vmem [resolvable:$true] %s526
      %529 = dma.vmem_to_hbm [thread:$0]  %s527, 128, %s9, [#allocation5]
    $region49: #{tpu_custom_call.1} parent=1 // pred_fallthru
      _
    // Predicated region
    $region50: #{tpu_custom_call.1} parent=1 // pred_check
      _
    $region51: #{tpu_custom_call.1} parent=1 // pred_check_branch
      %531 = sbr.rel (0) target = $region53
    $region52: #{tpu_custom_call.1} parent=1 // pred_region
      %s533 = ssub.s32 128, 128
      %534 = vsyncadd [#allocation10], %s533
      %s536 = sshll.u32 [#allocation9], 4
      %s537 = int_to_ptr.vmem [resolvable:$true] %s536
      %539 = dma.vmem_to_hbm [thread:$0]  %s537, 128, %s10, [#allocation10]
    $region53: #{tpu_custom_call.1} parent=1 // pred_fallthru
      _
    // Predicated region
    $region54: #{tpu_custom_call.1} parent=1 // pred_check
      _
    $region55: #{tpu_custom_call.1} parent=1 // pred_check_branch
      %541 = sbr.rel (0) target = $region57
    $region56: #{tpu_custom_call.1} parent=1 // pred_region
      %s543 = ssub.s32 128, 128
      %544 = vsyncadd [#allocation10], %s543
      %s546 = sshll.u32 [#allocation11], 4
      %s547 = int_to_ptr.vmem [resolvable:$true] %s546
      %549 = dma.vmem_to_hbm [thread:$0]  %s547, 128, %s11, [#allocation10]
    $region57: #{tpu_custom_call.1} parent=1 // pred_fallthru
      _
    // Predicated region
    $region58: #{tpu_custom_call.1} parent=1 // pred_check
      _
    $region59: #{tpu_custom_call.1} parent=1 // pred_check_branch
      %551 = sbr.rel (0) target = $region61
    $region60: #{tpu_custom_call.1} parent=1 // pred_region
      %552 = dma.done [#allocation5], 128
    $region61: #{tpu_custom_call.1} parent=1 // pred_fallthru
      _
    // Predicated region
    $region62: #{tpu_custom_call.1} parent=1 // pred_check
      _
    $region63: #{tpu_custom_call.1} parent=1 // pred_check_branch
      %554 = sbr.rel (0) target = $region65
    $region64: #{tpu_custom_call.1} parent=1 // pred_region
      %555 = dma.done [#allocation10], 128
    $region65: #{tpu_custom_call.1} parent=1 // pred_fallthru
      _
    // Predicated region
    $region66: #{tpu_custom_call.1} parent=1 // pred_check
      _
    $region67: #{tpu_custom_call.1} parent=1 // pred_check_branch
      %557 = sbr.rel (0) target = $region69
    $region68: #{tpu_custom_call.1} parent=1 // pred_region
      %558 = dma.done [#allocation10], 128
    $region69: #{tpu_custom_call.1} parent=1 // pred_fallthru
      _
    %559 = vsyncpa [#allocation4], 1
    %560 = vsyncpa [#allocation7], 1
    %561 = vsyncpa [#allocation5], 1
    %562 = vsyncpa [#allocation10], 1

</llo_original>
